<compile_context>
chip_gen: v5e
topology: v5e:2x2
jax: 0.10.0
libtpu: 0.0.40
codegen_flags: <defaults>
</compile_context>

<pallas_src>
import functools
import math

import jax
import jax.numpy as jnp
from jax.experimental import pallas as pl
from jax.experimental.pallas import tpu as pltpu


# ---------------------------------------------------------------------------
# Buffer setup (init-time glue, equivalent to register_buffer in __init__)
# ---------------------------------------------------------------------------
def make_positional_encoding(max_len: int, d_model: int, dtype=jnp.float32):
    """The `pe` buffer of PositionalEncoding, squeezed to (max_len, d_model)."""
    position = jnp.arange(max_len, dtype=jnp.float32)[:, None]            # (L, 1)
    div_term = jnp.exp(
        jnp.arange(0, d_model, 2, dtype=jnp.float32)
        * (-math.log(10000.0) / d_model)
    )                                                                      # (D/2,)
    pe = jnp.zeros((max_len, d_model), dtype=jnp.float32)
    pe = pe.at[:, 0::2].set(jnp.sin(position * div_term))
    pe = pe.at[:, 1::2].set(jnp.cos(position * div_term))
    return pe.astype(dtype)


# ---------------------------------------------------------------------------
# Kernels
# ---------------------------------------------------------------------------
def _pe_add_kernel(x_ref, pe_ref, o_ref):
    # x_ref: (B, T), pe_ref: (1, T) -> broadcast add over the batch rows.
    o_ref[...] = x_ref[...] + pe_ref[...]


def _pe_add_dropout_prng_kernel(seed_ref, x_ref, pe_ref, o_ref, *,
                                threshold, inv_keep):
    # In-kernel hardware PRNG: no uint32 bits stream from HBM.
    # Seed is mixed with program_id so every grid block (possibly running on a
    # different TensorCore) draws an independent stream.
    pltpu.prng_seed(seed_ref[0], seed_ref[1], pl.program_id(0))
    bits = pltpu.bitcast(pltpu.prng_random_bits(x_ref.shape), jnp.uint32)
    # keep iff bits >= threshold (prob = 1 - p); 1/(1-p) scale folded in.
    y = (x_ref[...] + pe_ref[...]) * jnp.asarray(inv_keep, x_ref.dtype)
    keep = bits >= jnp.uint32(threshold)
    o_ref[...] = jnp.where(keep, y, jnp.zeros_like(y))


def _pe_add_dropout_bits_kernel(x_ref, pe_ref, bits_ref, o_ref, *,
                                threshold, inv_keep):
    # Fallback path: pre-generated uint32 bits streamed in as an operand.
    y = (x_ref[...] + pe_ref[...]) * jnp.asarray(inv_keep, x_ref.dtype)
    keep = bits_ref[...] >= jnp.uint32(threshold)
    o_ref[...] = jnp.where(keep, y, jnp.zeros_like(y))


# ---------------------------------------------------------------------------
# Tiling helper
# ---------------------------------------------------------------------------
def _choose_col_tile(n_cols: int, n_rows: int, itemsize: int,
                     target_block_bytes: int = 2 << 20) -> int:
    """Largest T that divides n_cols, is a multiple of 128, and keeps a
    (n_rows, T) block under ~target_block_bytes.  Falls back to the full
    extent (always a legal block) when n_cols is not 128-aligned."""
    if n_cols % 128 != 0:
        return n_cols
    best = 128
    for t in range(128, n_cols + 1, 128):
        if n_cols % t == 0 and n_rows * t * itemsize <= target_block_bytes:
            best = t
    return best


# ---------------------------------------------------------------------------
# Forward wrapper
# ---------------------------------------------------------------------------
def positional_encoding_forward(x, pe, *, dropout_p=0.1, training=False,
                                rng_key=None):
    """x: (B, S, D); pe: (max_len, D).  Returns dropout(x + pe[:S][None])."""
    B, S, D = x.shape
    SD = S * D
    dtype = x.dtype

    # Lane-dense flattening: (B, S, D) -> (B, S*D), pe[:S] -> (1, S*D).
    x2 = x.reshape(B, SD)
    pe2 = pe[:S].astype(dtype).reshape(1, SD)

    on_tpu = jax.devices()[0].platform == "tpu"
    do_dropout = training and dropout_p > 0.0
    use_inkernel_prng = do_dropout and on_tpu

    itemsize = jnp.dtype(dtype).itemsize
    if do_dropout and not use_inkernel_prng:
        itemsize = max(itemsize, 4)  # uint32 bits stream only in fallback path
    T = _choose_col_tile(SD, B, itemsize)
    grid = (SD // T,)

    x_spec = pl.BlockSpec((B, T), lambda t: (0, t))
    pe_spec = pl.BlockSpec((1, T), lambda t: (0, t))
    out_spec = pl.BlockSpec((B, T), lambda t: (0, t))
    cparams = pltpu.CompilerParams(dimension_semantics=("parallel",))

    if not do_dropout:
        out2 = pl.pallas_call(
            _pe_add_kernel,
            out_shape=jax.ShapeDtypeStruct((B, SD), dtype),
            grid=grid,
            in_specs=[x_spec, pe_spec],
            out_specs=out_spec,
            compiler_params=cparams,
        )(x2, pe2)
        return out2.reshape(B, S, D)

    if rng_key is None:
        rng_key = jax.random.PRNGKey(0)
    threshold = min(int(round(dropout_p * 2.0 ** 32)), 2 ** 32 - 1)
    inv_keep = 1.0 / (1.0 - dropout_p)

    if use_inkernel_prng:
        # Two int32 seed words in SMEM, mixed with program_id inside the kernel.
        seeds = jax.random.randint(
            rng_key, (2,), 0, jnp.iinfo(jnp.int32).max, dtype=jnp.int32)
        kernel = functools.partial(
            _pe_add_dropout_prng_kernel, threshold=threshold, inv_keep=inv_keep)
        out2 = pl.pallas_call(
            kernel,
            out_shape=jax.ShapeDtypeStruct((B, SD), dtype),
            grid=grid,
            in_specs=[pl.BlockSpec(memory_space=pltpu.MemorySpace.SMEM),
                      x_spec, pe_spec],
            out_specs=out_spec,
            compiler_params=cparams,
        )(seeds, x2, pe2)
        return out2.reshape(B, S, D)

    # Fallback (non-TPU / interpret environments): stream uint32 bits from HBM.
    bits = jax.random.bits(rng_key, (B, SD), dtype=jnp.uint32)
    kernel = functools.partial(
        _pe_add_dropout_bits_kernel, threshold=threshold, inv_keep=inv_keep)
    out2 = pl.pallas_call(
        kernel,
        out_shape=jax.ShapeDtypeStruct((B, SD), dtype),
        grid=grid,
        in_specs=[x_spec, pe_spec, x_spec],  # bits tiled like x
        out_specs=out_spec,
        compiler_params=cparams,
    )(x2, pe2, bits)
    return out2.reshape(B, S, D)


# ---------------------------------------------------------------------------
# Demo / self-test
# ---------------------------------------------------------------------------
if __name__ == "__main__":
    B, S, D = 2, 8, 32        # batch, seq, d_model
    MAX_LEN = 16
    DROPOUT_P = 0.1

    key = jax.random.PRNGKey(0)
    x_key, drop_key = jax.random.split(key)
    x = jax.random.normal(x_key, (B, S, D), dtype=jnp.float32)

    pe = make_positional_encoding(MAX_LEN, D, dtype=jnp.float32)
    ref = x + pe[:S][None, :, :]

    # Eval-mode forward (dropout == identity): must match pure-JAX reference.
    out_eval = positional_encoding_forward(x, pe, dropout_p=DROPOUT_P, training=False)
    out_eval = jax.block_until_ready(out_eval)
    assert out_eval.shape == (B, S, D)
    assert jnp.allclose(out_eval, ref, atol=1e-6, rtol=1e-6), "eval-mode mismatch"

    # Training-mode forward (Bernoulli keep + 1/(1-p) scaling, done in-kernel).
    out_train = positional_encoding_forward(
        x, pe, dropout_p=DROPOUT_P, training=True, rng_key=drop_key
    )
    out_train = jax.block_until_ready(out_train)
    assert out_train.shape == (B, S, D)
    assert bool(jnp.all(jnp.isfinite(out_train)))
    # Kept elements are scaled by 1/(1-p); dropped elements are exactly zero.
    scaled_ref = ref / (1.0 - DROPOUT_P)
    kept_or_zero = jnp.isclose(out_train, scaled_ref, atol=1e-5) | (out_train == 0.0)
    assert bool(jnp.all(kept_or_zero)), "training-mode dropout semantics mismatch"

    print("KERNEL_OK")
</pallas_src>

<mosaic_0001>
module attributes {stable_mosaic.version = 11 : i64} {
  func.func @_pe_add_kernel(%arg0: i32, %arg1: memref<2x256xf32, #tpu.memory_space<vmem>>, %arg2: memref<1x256xf32, #tpu.memory_space<vmem>>, %arg3: memref<2x256xf32, #tpu.memory_space<vmem>>) attributes {dimension_semantics = [#tpu.dimension_semantics<parallel>], iteration_bounds = array<i64: 1>, scalar_prefetch = 0 : i64, scratch_operands = 0 : i64, tpu.core_type = #tpu.core_type<tc>, window_params = [{transform_indices = @transform_0, window_bounds = array<i64: 2, 256>}, {transform_indices = @transform_1, window_bounds = array<i64: 1, 256>}, {transform_indices = @transform_2, window_bounds = array<i64: 2, 256>}]} {
    %c0 = arith.constant 0 : index
    %c0_0 = arith.constant 0 : index
    %0 = vector.load %arg1[%c0, %c0_0] : memref<2x256xf32, #tpu.memory_space<vmem>>, vector<2x256xf32>
    %c0_1 = arith.constant 0 : index
    %c0_2 = arith.constant 0 : index
    %1 = vector.load %arg2[%c0_1, %c0_2] : memref<1x256xf32, #tpu.memory_space<vmem>>, vector<1x256xf32>
    %2 = vector.broadcast %1 : vector<1x256xf32> to vector<2x256xf32>
    %3 = arith.addf %0, %2 : vector<2x256xf32>
    %c0_3 = arith.constant 0 : index
    %c0_4 = arith.constant 0 : index
    %4 = vector.load %arg3[%c0_3, %c0_4] : memref<2x256xf32, #tpu.memory_space<vmem>>, vector<2x256xf32>
    tpu.vector_store %arg3[%c0_3, %c0_4], %3 {strides = array<i32>} : memref<2x256xf32, #tpu.memory_space<vmem>>, vector<2x256xf32>,
    return
  }
  func.func @transform_0(%arg0: i32) -> (i32, i32) {
    %c0_i32 = arith.constant 0 : i32
    %c0_i32_0 = arith.constant 0 : i32
    return %c0_i32, %arg0 : i32, i32
  }
  func.func @transform_1(%arg0: i32) -> (i32, i32) {
    %c0_i32 = arith.constant 0 : i32
    %c0_i32_0 = arith.constant 0 : i32
    return %c0_i32, %arg0 : i32, i32
  }
  func.func @transform_2(%arg0: i32) -> (i32, i32) {
    %c0_i32 = arith.constant 0 : i32
    %c0_i32_0 = arith.constant 0 : i32
    return %c0_i32, %arg0 : i32, i32
  }
}

</mosaic_0001>

<llo_original>
// kernel: tpu_custom_call.1
$region0: #{tpu_custom_call.1}
  #allocation0 [shape = 'u32[]', space=smem, size = 0x4, offset = 0x4, fixed_abs, tag = 'smem constant byte address 0x4 - core index']
  #allocation1 [shape = 'u32[72,128]{1,0:T(1,128)}', space=vmem, size = 0x9000, scoped, tag = 'internal scratch']
  %s0 = inlined_call_operand.hbm [shape: f32[2,256], index: 0, kind: input, shape index: {}]
  %s1 = inlined_call_operand.hbm [shape: f32[1,256], index: 1, kind: input, shape index: {}]
  %s2 = inlined_call_operand.hbm [shape: f32[2,256], index: 2, kind: output, shape index: {}]
  %s3 = sld [smem:[#allocation0]]
  $region26: #{tpu_custom_call.1} parent=0
    _
  %s5 = ssub.s32 1, %s3
  %s6 = scalar_select 0, %s5, %s3
  $region1: #{tpu_custom_call.1} parent=0
    #allocation2 [shape = 'u8[2048]{0}', space=vmem, size = 0x800, scoped, tag = 'input window, operand 0, single buffered']
    #allocation3 [shape = 's32[1]{0}', space=sflag, size = 0x4, scoped, tag = 'scoped memory for tpu_custom_call.1']
    #allocation4 [shape = 's32[1]{0}', space=sflag, size = 0x4, scoped, tag = 'scoped memory for tpu_custom_call.1']
    #allocation5 [shape = 'u8[1024]{0}', space=vmem, size = 0x400, scoped, tag = 'input window, operand 1, single buffered']
    #allocation6 [shape = 's32[1]{0}', space=sflag, size = 0x4, scoped, tag = 'scoped memory for tpu_custom_call.1']
    #allocation7 [shape = 'u8[2048]{0}', space=vmem, size = 0x800, scoped, tag = 'output window, operand 0, single buffered']
    %7 = vsyncpa [#allocation3], 0
    %8 = vsyncpa [#allocation6], 0
    %9 = vsyncpa [#allocation4], 0
    // Predicated region
    $region2: #{tpu_custom_call.1} parent=1 // pred_check
      _
    $region3: #{tpu_custom_call.1} parent=1 // pred_check_branch
      %11 = sbr.rel (0) target = $region5
    $region4: #{tpu_custom_call.1} parent=1 // pred_region
      %13 = vsyncadd [#allocation3], 0
      %s15 = sshll.u32 %s0, 4
      %s16 = int_to_ptr.hbm [resolvable:$true] %s15
      %s17 = sshll.u32 [#allocation2], 4
      %s18 = int_to_ptr.vmem [resolvable:$true] %s17
      %20 = dma.hbm_to_vmem [thread:$0]  %s16, 64, %s18, [#allocation3]
    $region5: #{tpu_custom_call.1} parent=1 // pred_fallthru
      _
    // Predicated region
    $region6: #{tpu_custom_call.1} parent=1 // pred_check
      _
    $region7: #{tpu_custom_call.1} parent=1 // pred_check_branch
      %22 = sbr.rel (0) target = $region9
    $region8: #{tpu_custom_call.1} parent=1 // pred_region
      %24 = vsyncadd [#allocation6], 0
      %s26 = sshll.u32 %s1, 4
      %s27 = int_to_ptr.hbm [resolvable:$true] %s26
      %s28 = sshll.u32 [#allocation5], 4
      %s29 = int_to_ptr.vmem [resolvable:$true] %s28
      %31 = dma.hbm_to_vmem [thread:$0]  %s27, 32, %s29, [#allocation6]
    $region9: #{tpu_custom_call.1} parent=1 // pred_fallthru
      _
    // Predicated region
    $region10: #{tpu_custom_call.1} parent=1 // pred_check
      _
    $region11: #{tpu_custom_call.1} parent=1 // pred_check_branch
      %33 = sbr.rel (0) target = $region13
    $region12: #{tpu_custom_call.1} parent=1 // pred_region
      %35 = dma.done [#allocation3], 64
    $region13: #{tpu_custom_call.1} parent=1 // pred_fallthru
      _
    // Predicated region
    $region14: #{tpu_custom_call.1} parent=1 // pred_check
      _
    $region15: #{tpu_custom_call.1} parent=1 // pred_check_branch
      %37 = sbr.rel (0) target = $region17
    $region16: #{tpu_custom_call.1} parent=1 // pred_region
      %39 = dma.done [#allocation6], 32
    $region17: #{tpu_custom_call.1} parent=1 // pred_fallthru
      _
    %v40 = vld [vmem:[#allocation2] sm:$0xf]
    %v41 = vld [vmem:[#allocation5] sm:$0x3]
    %v43 = vperm.slane %v41, 0
    %v44 = vperm.slane %v41, 1
    %v45 = vrot.slane %v44, 6
    %vm46 = vcmask 1041408
    %v47 = vsel %vm46, %v43, %v45
    %v49 = vadd.f32 %v40, %v47
    %50 = vst [vmem:[#allocation7] sm:$0xf] %v49
    // Predicated region
    $region18: #{tpu_custom_call.1} parent=1 // pred_check
      _
    $region19: #{tpu_custom_call.1} parent=1 // pred_check_branch
      %52 = sbr.rel (0) target = $region21
    $region20: #{tpu_custom_call.1} parent=1 // pred_region
      %54 = vsyncadd [#allocation4], 0
      %s56 = sshll.u32 [#allocation7], 4
      %s57 = int_to_ptr.vmem [resolvable:$true] %s56
      %s58 = sshll.u32 %s2, 4
      %s59 = int_to_ptr.hbm [resolvable:$true] %s58
      %61 = dma.vmem_to_hbm [thread:$0]  %s57, 64, %s59, [#allocation4]
    $region21: #{tpu_custom_call.1} parent=1 // pred_fallthru
      _
    // Predicated region
    $region22: #{tpu_custom_call.1} parent=1 // pred_check
      _
    $region23: #{tpu_custom_call.1} parent=1 // pred_check_branch
      %63 = sbr.rel (0) target = $region25
    $region24: #{tpu_custom_call.1} parent=1 // pred_region
      %65 = dma.done [#allocation4], 64
    $region25: #{tpu_custom_call.1} parent=1 // pred_fallthru
      _
    %66 = vsyncpa [#allocation3], 1
    %67 = vsyncpa [#allocation6], 1
    %68 = vsyncpa [#allocation4], 1

</llo_original>
